<compile_context>
chip_gen: v6e
topology: v6e:2x2x1
jax: 0.10.0
libtpu: 0.0.40
codegen_flags: <defaults>
</compile_context>

<pallas_src>
import functools

import jax
import jax.numpy as jnp
from jax.experimental import pallas as pl
from jax.experimental.pallas import tpu as pltpu


def _round_up(n, m):
    return ((n + m - 1) // m) * m


def _gating_kernel(x_ref, w1_ref, b1_ref, w2_ref, b2_ref, w3_ref, b3_ref,
                   mask_ref, o_ref, *, n_components):
    """Whole MLP + mask + log_softmax for one batch tile, all in VMEM."""
    mxu_dtype = w1_ref.dtype

    # Cast activations to the MXU dtype just before each matmul; accumulate f32.
    x = x_ref[...].astype(mxu_dtype)

    # Hidden layer 1 (MXU) + bias + relu (VPU, f32)
    h = jnp.dot(x, w1_ref[...], preferred_element_type=jnp.float32) + b1_ref[...]
    h = jnp.maximum(h, 0.0)

    # Hidden layer 2
    h = jnp.dot(h.astype(mxu_dtype), w2_ref[...],
                preferred_element_type=jnp.float32) + b2_ref[...]
    h = jnp.maximum(h, 0.0)

    # Last layer -> max_n_components logits (f32)
    logits = jnp.dot(h.astype(mxu_dtype), w3_ref[...],
                     preferred_element_type=jnp.float32) + b3_ref[...]

    # Component mask (broadcast over batch), then static slice to active comps
    logits = mask_ref[...] * logits
    z = logits[:, :n_components]

    # Numerically-stable log_softmax over dim=1 (exp/log go to the EUP)
    z_max = jnp.max(z, axis=1, keepdims=True)
    z_shift = z - z_max
    lse = jnp.log(jnp.sum(jnp.exp(z_shift), axis=1, keepdims=True))
    o_ref[...] = (z_shift - lse).astype(o_ref.dtype)


def gating_network_forward(x, params, mask, n_components, *, tile_b=None,
                           mxu_dtype=jnp.bfloat16):
    """x: (B, obs_dim) float32. Returns (B, n_components) float32 log-probs."""
    w1, b1, w2, b2, w3, b3 = params
    B, obs_dim = x.shape
    h1 = w1.shape[1]
    h2 = w2.shape[1]
    max_nc = w3.shape[1]

    # Big tiles amortize the ~0.35us per-grid-step overhead; cap at 512 so very
    # large batches still produce >=2 "parallel" steps for megacore sharding.
    if tile_b is None:
        tile_b = min(512, _round_up(B, 8))
    tile_b = max(8, _round_up(int(tile_b), 8))

    n_tiles = pl.cdiv(B, tile_b)
    b_padded = n_tiles * tile_b
    if b_padded != B:
        # Zero-padded rows compute harmless finite values and are sliced off.
        x = jnp.pad(x, ((0, b_padded - B), (0, 0)))

    # Weights to bf16 once (tiny, grid-resident); biases/mask stay f32.
    w1_c = w1.astype(mxu_dtype)
    w2_c = w2.astype(mxu_dtype)
    w3_c = w3.astype(mxu_dtype)
    b1_2d = b1.reshape(1, h1).astype(jnp.float32)
    b2_2d = b2.reshape(1, h2).astype(jnp.float32)
    b3_2d = b3.reshape(1, max_nc).astype(jnp.float32)
    mask_2d = mask.reshape(1, max_nc).astype(jnp.float32)

    kernel = functools.partial(_gating_kernel, n_components=n_components)

    # Grid-invariant operands: constant index maps -> fetched once, VMEM-resident.
    full = lambda shape: pl.BlockSpec(shape, lambda i: (0,) * len(shape))

    out = pl.pallas_call(
        kernel,
        out_shape=jax.ShapeDtypeStruct((b_padded, n_components), jnp.float32),
        grid_spec=pltpu.PrefetchScalarGridSpec(
            num_scalar_prefetch=0,
            grid=(n_tiles,),
            in_specs=[
                pl.BlockSpec((tile_b, obs_dim), lambda i: (i, 0)),   # x tile (f32)
                full((obs_dim, h1)),                                  # W1 (bf16)
                full((1, h1)),                                        # b1
                full((h1, h2)),                                       # W2 (bf16)
                full((1, h2)),                                        # b2
                full((h2, max_nc)),                                   # W3 (bf16)
                full((1, max_nc)),                                    # b3
                full((1, max_nc)),                                    # mask
            ],
            out_specs=pl.BlockSpec((tile_b, n_components), lambda i: (i, 0)),
        ),
        compiler_params=pltpu.CompilerParams(
            dimension_semantics=("parallel",)),
    )(x, w1_c, b1_2d, w2_c, b2_2d, w3_c, b3_2d, mask_2d)

    return out[:B] if b_padded != B else out


def init_params(key, obs_dim, hidden_sizes, max_n_components):
    """Deterministic 'normal' init (scale 0.01 on last layer like reference).

    Weights are stored pre-transposed as (in_features, out_features) so the
    kernel does plain `x @ W + b`.
    """
    sizes = [obs_dim] + list(hidden_sizes)
    params = []
    keys = jax.random.split(key, len(hidden_sizes) + 1)
    for i, (din, dout) in enumerate(zip(sizes[:-1], sizes[1:])):
        w = jax.random.normal(keys[i], (din, dout), jnp.float32) / jnp.sqrt(din)
        b = jnp.zeros((dout,), jnp.float32)
        params.extend([w, b])
    din = sizes[-1]
    w_last = 0.01 * jax.random.normal(keys[-1], (din, max_n_components), jnp.float32)
    b_last = jnp.zeros((max_n_components,), jnp.float32)
    params.extend([w_last, b_last])
    return tuple(params)


def reference_forward(x, params, mask, n_components, mxu_dtype=jnp.float32):
    """Pure-JAX reference; `mxu_dtype` mirrors the kernel's matmul-input cast."""
    w1, b1, w2, b2, w3, b3 = params
    cast = lambda a: a.astype(mxu_dtype)
    h = jnp.dot(cast(x), cast(w1), preferred_element_type=jnp.float32) + b1
    h = jnp.maximum(h, 0.0)
    h = jnp.dot(cast(h), cast(w2), preferred_element_type=jnp.float32) + b2
    h = jnp.maximum(h, 0.0)
    logits = (jnp.dot(cast(h), cast(w3), preferred_element_type=jnp.float32) + b3) * mask
    z = logits[:, :n_components]
    return jax.nn.log_softmax(z, axis=1)


if __name__ == "__main__":
    key = jax.random.PRNGKey(0)

    obs_dim = 16
    hidden_sizes = (64, 64)
    init_n_components = 4
    max_n_components = 8
    batch = 12  # deliberately NOT a multiple of 8 to exercise the padding path

    k_x, k_p = jax.random.split(key)
    x = jax.random.normal(k_x, (batch, obs_dim), jnp.float32)
    params = init_params(k_p, obs_dim, hidden_sizes, max_n_components)

    # mask: ones on the first init_n_components components
    mask = jnp.zeros((max_n_components,), jnp.float32).at[:init_n_components].set(1.0)

    out = gating_network_forward(x, params, mask, init_n_components)
    out = jax.block_until_ready(out)
    assert out.shape == (batch, init_n_components)

    # Reference mirroring the kernel's bf16 MXU inputs (tight tolerance) ...
    ref_bf16 = reference_forward(x, params, mask, init_n_components,
                                 mxu_dtype=jnp.bfloat16)
    assert jnp.allclose(out, ref_bf16, atol=1e-4, rtol=1e-4), \
        "mismatch vs bf16-matmul JAX reference"
    # ... and the full-f32 reference (loose tolerance for the bf16 cast).
    ref_f32 = reference_forward(x, params, mask, init_n_components)
    assert jnp.allclose(out, ref_f32, atol=5e-2, rtol=5e-2), \
        "mismatch vs f32 JAX reference"
    # log_softmax rows must normalize to 1 in prob space
    assert jnp.allclose(jnp.sum(jnp.exp(out), axis=1), 1.0, atol=1e-5)

    print("KERNEL_OK")
</pallas_src>

<mosaic_0001>
module attributes {stable_mosaic.version = 11 : i64} {
  func.func @_gating_kernel(%arg0: i32, %arg1: memref<16x16xf32, #tpu.memory_space<vmem>>, %arg2: memref<16x64xbf16, #tpu.memory_space<vmem>>, %arg3: memref<1x64xf32, #tpu.memory_space<vmem>>, %arg4: memref<64x64xbf16, #tpu.memory_space<vmem>>, %arg5: memref<1x64xf32, #tpu.memory_space<vmem>>, %arg6: memref<64x8xbf16, #tpu.memory_space<vmem>>, %arg7: memref<1x8xf32, #tpu.memory_space<vmem>>, %arg8: memref<1x8xf32, #tpu.memory_space<vmem>>, %arg9: memref<16x4xf32, #tpu.memory_space<vmem>>) attributes {dimension_semantics = [#tpu.dimension_semantics<parallel>], iteration_bounds = array<i64: 1>, scalar_prefetch = 0 : i64, scratch_operands = 0 : i64, tpu.core_type = #tpu.core_type<tc>, window_params = [{transform_indices = @transform_0, window_bounds = array<i64: 16, 16>}, {pipeline_mode = #tpu.pipeline_mode<synchronous>, transform_indices = @transform_1, window_bounds = array<i64: 16, 64>}, {pipeline_mode = #tpu.pipeline_mode<synchronous>, transform_indices = @transform_2, window_bounds = array<i64: 1, 64>}, {pipeline_mode = #tpu.pipeline_mode<synchronous>, transform_indices = @transform_3, window_bounds = array<i64: 64, 64>}, {pipeline_mode = #tpu.pipeline_mode<synchronous>, transform_indices = @transform_4, window_bounds = array<i64: 1, 64>}, {pipeline_mode = #tpu.pipeline_mode<synchronous>, transform_indices = @transform_5, window_bounds = array<i64: 64, 8>}, {pipeline_mode = #tpu.pipeline_mode<synchronous>, transform_indices = @transform_6, window_bounds = array<i64: 1, 8>}, {pipeline_mode = #tpu.pipeline_mode<synchronous>, transform_indices = @transform_7, window_bounds = array<i64: 1, 8>}, {transform_indices = @transform_8, window_bounds = array<i64: 16, 4>}]} {
    %c0 = arith.constant 0 : index
    %c0_0 = arith.constant 0 : index
    %0 = vector.load %arg1[%c0, %c0_0] : memref<16x16xf32, #tpu.memory_space<vmem>>, vector<16x16xf32>
    %1 = arith.truncf %0 : vector<16x16xf32> to vector<16x16xbf16>
    %c0_1 = arith.constant 0 : index
    %c0_2 = arith.constant 0 : index
    %2 = vector.load %arg2[%c0_1, %c0_2] : memref<16x64xbf16, #tpu.memory_space<vmem>>, vector<16x64xbf16>
    %cst = arith.constant dense<0.000000e+00> : vector<16x64xf32>
    %3 = tpu.matmul %1, %2, %cst {dimension_numbers = #tpu.dot_dimension_numbers<[1], [0], [0], [1], [0, 0, 1, 1], [], []>} : vector<16x16xbf16>, vector<16x64xbf16>, vector<16x64xf32> -> vector<16x64xf32>
    %c0_3 = arith.constant 0 : index
    %c0_4 = arith.constant 0 : index
    %4 = vector.load %arg3[%c0_3, %c0_4] : memref<1x64xf32, #tpu.memory_space<vmem>>, vector<1x64xf32>
    %5 = vector.broadcast %4 : vector<1x64xf32> to vector<16x64xf32>
    %6 = arith.addf %3, %5 : vector<16x64xf32>
    %cst_5 = arith.constant 0.000000e+00 : f32
    %7 = vector.broadcast %cst_5 : f32 to vector<16x64xf32>
    %8 = arith.maximumf %6, %7 : vector<16x64xf32>
    %9 = arith.truncf %8 : vector<16x64xf32> to vector<16x64xbf16>
    %c0_6 = arith.constant 0 : index
    %c0_7 = arith.constant 0 : index
    %10 = vector.load %arg4[%c0_6, %c0_7] : memref<64x64xbf16, #tpu.memory_space<vmem>>, vector<64x64xbf16>
    %cst_8 = arith.constant dense<0.000000e+00> : vector<16x64xf32>
    %11 = tpu.matmul %9, %10, %cst_8 {dimension_numbers = #tpu.dot_dimension_numbers<[1], [0], [0], [1], [0, 0, 1, 1], [], []>} : vector<16x64xbf16>, vector<64x64xbf16>, vector<16x64xf32> -> vector<16x64xf32>
    %c0_9 = arith.constant 0 : index
    %c0_10 = arith.constant 0 : index
    %12 = vector.load %arg5[%c0_9, %c0_10] : memref<1x64xf32, #tpu.memory_space<vmem>>, vector<1x64xf32>
    %13 = vector.broadcast %12 : vector<1x64xf32> to vector<16x64xf32>
    %14 = arith.addf %11, %13 : vector<16x64xf32>
    %cst_11 = arith.constant 0.000000e+00 : f32
    %15 = vector.broadcast %cst_11 : f32 to vector<16x64xf32>
    %16 = arith.maximumf %14, %15 : vector<16x64xf32>
    %17 = arith.truncf %16 : vector<16x64xf32> to vector<16x64xbf16>
    %c0_12 = arith.constant 0 : index
    %c0_13 = arith.constant 0 : index
    %18 = vector.load %arg6[%c0_12, %c0_13] : memref<64x8xbf16, #tpu.memory_space<vmem>>, vector<64x8xbf16>
    %cst_14 = arith.constant dense<0.000000e+00> : vector<16x8xf32>
    %19 = tpu.matmul %17, %18, %cst_14 {dimension_numbers = #tpu.dot_dimension_numbers<[1], [0], [0], [1], [0, 0, 1, 1], [], []>} : vector<16x64xbf16>, vector<64x8xbf16>, vector<16x8xf32> -> vector<16x8xf32>
    %c0_15 = arith.constant 0 : index
    %c0_16 = arith.constant 0 : index
    %20 = vector.load %arg7[%c0_15, %c0_16] : memref<1x8xf32, #tpu.memory_space<vmem>>, vector<1x8xf32>
    %21 = vector.broadcast %20 : vector<1x8xf32> to vector<16x8xf32>
    %22 = arith.addf %19, %21 : vector<16x8xf32>
    %c0_17 = arith.constant 0 : index
    %c0_18 = arith.constant 0 : index
    %23 = vector.load %arg8[%c0_17, %c0_18] : memref<1x8xf32, #tpu.memory_space<vmem>>, vector<1x8xf32>
    %24 = vector.broadcast %23 : vector<1x8xf32> to vector<16x8xf32>
    %25 = arith.mulf %24, %22 : vector<16x8xf32>
    %26 = vector.extract_strided_slice %25 {offsets = [0, 0], sizes = [16, 4], strides = [1, 1]} : vector<16x8xf32> to vector<16x4xf32>
    %cst_19 = arith.constant dense<0xFF800000> : vector<16xf32>
    %27 = vector.multi_reduction <maximumf>, %26, %cst_19 [1] : vector<16x4xf32> to vector<16xf32>
    %28 = vector.shape_cast %27 : vector<16xf32> to vector<16x1xf32>
    %29 = vector.broadcast %28 : vector<16x1xf32> to vector<16x4xf32>
    %30 = arith.subf %26, %29 : vector<16x4xf32>
    %31 = math.exp %30 : vector<16x4xf32>
    %cst_20 = arith.constant dense<0.000000e+00> : vector<16xf32>
    %32 = vector.multi_reduction <add>, %31, %cst_20 [1] : vector<16x4xf32> to vector<16xf32>
    %33 = vector.shape_cast %32 : vector<16xf32> to vector<16x1xf32>
    %34 = math.log %33 : vector<16x1xf32>
    %35 = vector.broadcast %34 : vector<16x1xf32> to vector<16x4xf32>
    %36 = arith.subf %30, %35 : vector<16x4xf32>
    %c0_21 = arith.constant 0 : index
    %c0_22 = arith.constant 0 : index
    %37 = vector.load %arg9[%c0_21, %c0_22] : memref<16x4xf32, #tpu.memory_space<vmem>>, vector<16x4xf32>
    tpu.vector_store %arg9[%c0_21, %c0_22], %36 {strides = array<i32>} : memref<16x4xf32, #tpu.memory_space<vmem>>, vector<16x4xf32>,
    return
  }
  func.func @transform_0(%arg0: i32) -> (i32, i32) {
    %c0_i32 = arith.constant 0 : i32
    %c0_i32_0 = arith.constant 0 : i32
    return %arg0, %c0_i32 : i32, i32
  }
  func.func @transform_1(%arg0: i32) -> (i32, i32) {
    %c0_i32 = arith.constant 0 : i32
    %c0_i32_0 = arith.constant 0 : i32
    %c0_i32_1 = arith.constant 0 : i32
    return %c0_i32, %c0_i32_0 : i32, i32
  }
  func.func @transform_2(%arg0: i32) -> (i32, i32) {
    %c0_i32 = arith.constant 0 : i32
    %c0_i32_0 = arith.constant 0 : i32
    %c0_i32_1 = arith.constant 0 : i32
    return %c0_i32, %c0_i32_0 : i32, i32
  }
  func.func @transform_3(%arg0: i32) -> (i32, i32) {
    %c0_i32 = arith.constant 0 : i32
    %c0_i32_0 = arith.constant 0 : i32
    %c0_i32_1 = arith.constant 0 : i32
    return %c0_i32, %c0_i32_0 : i32, i32
  }
  func.func @transform_4(%arg0: i32) -> (i32, i32) {
    %c0_i32 = arith.constant 0 : i32
    %c0_i32_0 = arith.constant 0 : i32
    %c0_i32_1 = arith.constant 0 : i32
    return %c0_i32, %c0_i32_0 : i32, i32
  }
  func.func @transform_5(%arg0: i32) -> (i32, i32) {
    %c0_i32 = arith.constant 0 : i32
    %c0_i32_0 = arith.constant 0 : i32
    %c0_i32_1 = arith.constant 0 : i32
    return %c0_i32, %c0_i32_0 : i32, i32
  }
  func.func @transform_6(%arg0: i32) -> (i32, i32) {
    %c0_i32 = arith.constant 0 : i32
    %c0_i32_0 = arith.constant 0 : i32
    %c0_i32_1 = arith.constant 0 : i32
    return %c0_i32, %c0_i32_0 : i32, i32
  }
  func.func @transform_7(%arg0: i32) -> (i32, i32) {
    %c0_i32 = arith.constant 0 : i32
    %c0_i32_0 = arith.constant 0 : i32
    %c0_i32_1 = arith.constant 0 : i32
    return %c0_i32, %c0_i32_0 : i32, i32
  }
  func.func @transform_8(%arg0: i32) -> (i32, i32) {
    %c0_i32 = arith.constant 0 : i32
    %c0_i32_0 = arith.constant 0 : i32
    return %arg0, %c0_i32 : i32, i32
  }
}

</mosaic_0001>

<llo_original>
// kernel: tpu_custom_call.1
$region0: #{tpu_custom_call.1}
  #allocation0 [shape = 'u32[]', space=smem, size = 0x4, offset = 0x4, fixed_abs, tag = 'smem constant byte address 0x4 - core index']
  #allocation1 [shape = 'u32[144,128]{1,0:T(1,128)}', space=vmem, size = 0x12000, scoped, tag = 'internal scratch']
  %s0 = inlined_call_operand.hbm [shape: f32[16,16], index: 0, kind: input, shape index: {}]
  %s1 = inlined_call_operand.vmem [shape: bf16[16,64], index: 1, kind: input, shape index: {}]
  %s2 = inlined_call_operand.vmem [shape: f32[1,64], index: 2, kind: input, shape index: {}]
  %s3 = inlined_call_operand.vmem [shape: bf16[64,64], index: 3, kind: input, shape index: {}]
  %s4 = inlined_call_operand.hbm [shape: f32[1,64], index: 4, kind: input, shape index: {}]
  %s5 = inlined_call_operand.vmem [shape: bf16[64,8], index: 5, kind: input, shape index: {}]
  %s6 = inlined_call_operand.vmem [shape: f32[1,8], index: 6, kind: input, shape index: {}]
  %s7 = inlined_call_operand.vmem [shape: f32[1,8], index: 7, kind: input, shape index: {}]
  %s8 = inlined_call_operand.vmem [shape: f32[16,4], index: 8, kind: output, shape index: {}]
  %s9 = sld [smem:[#allocation0]]
  $region50: #{tpu_custom_call.1} parent=0
    _
  %s11 = ssub.s32 1, %s9
  %s12 = scalar_select 0, %s11, %s9
  $region1: #{tpu_custom_call.1} parent=0
    #allocation2 [shape = 'u8[8192]{0}', space=vmem, size = 0x2000, scoped, tag = 'input window, operand 0, single buffered']
    #allocation3 [shape = 's32[1]{0}', space=sflag, size = 0x4, scoped, tag = 'scoped memory for tpu_custom_call.1']
    #allocation4 [shape = 'u8[512]{0}', space=vmem, size = 0x400, scoped, tag = 'input window, operand 4, single buffered']
    #allocation5 [shape = 's32[1]{0}', space=sflag, size = 0x4, scoped, tag = 'scoped memory for tpu_custom_call.1']
    %13 = vsyncpa [#allocation3], 0
    %14 = vsyncpa [#allocation5], 0
    // Predicated region
    $region2: #{tpu_custom_call.1} parent=1 // pred_check
      _
    $region3: #{tpu_custom_call.1} parent=1 // pred_check_branch
      %16 = sbr.rel (0) target = $region5
    $region4: #{tpu_custom_call.1} parent=1 // pred_region
      %s18 = ssub.s32 256, 256
      %19 = vsyncadd [#allocation3], %s18
      %s20 = sshll.u32 [#allocation2], 4
      %s21 = int_to_ptr.vmem [resolvable:$true] %s20
      %26 = dma.hbm_to_vmem [thread:$0]  %s0, 256, %s21, [#allocation3], 128, 128, 8
    $region5: #{tpu_custom_call.1} parent=1 // pred_fallthru
      _
    // Predicated region
    $region6: #{tpu_custom_call.1} parent=1 // pred_check
      _
    $region7: #{tpu_custom_call.1} parent=1 // pred_check_branch
      %28 = sbr.rel (0) target = $region9
    $region8: #{tpu_custom_call.1} parent=1 // pred_region
      _
    $region9: #{tpu_custom_call.1} parent=1 // pred_fallthru
      _
    // Predicated region
    $region10: #{tpu_custom_call.1} parent=1 // pred_check
      _
    $region11: #{tpu_custom_call.1} parent=1 // pred_check_branch
      %30 = sbr.rel (0) target = $region13
    $region12: #{tpu_custom_call.1} parent=1 // pred_region
      _
    $region13: #{tpu_custom_call.1} parent=1 // pred_fallthru
      _
    // Predicated region
    $region14: #{tpu_custom_call.1} parent=1 // pred_check
      _
    $region15: #{tpu_custom_call.1} parent=1 // pred_check_branch
      %32 = sbr.rel (0) target = $region17
    $region16: #{tpu_custom_call.1} parent=1 // pred_region
      _
    $region17: #{tpu_custom_call.1} parent=1 // pred_fallthru
      _
    // Predicated region
    $region18: #{tpu_custom_call.1} parent=1 // pred_check
      _
    $region19: #{tpu_custom_call.1} parent=1 // pred_check_branch
      %34 = sbr.rel (0) target = $region21
    $region20: #{tpu_custom_call.1} parent=1 // pred_region
      %s36 = ssub.s32 16, 16
      %37 = vsyncadd [#allocation5], %s36
      %s39 = sshll.u32 [#allocation4], 4
      %s40 = int_to_ptr.vmem [resolvable:$true] %s39
      %42 = dma.hbm_to_vmem [thread:$0]  %s4, 16, %s40, [#allocation5]
    $region21: #{tpu_custom_call.1} parent=1 // pred_fallthru
      _
    // Predicated region
    $region22: #{tpu_custom_call.1} parent=1 // pred_check
      _
    $region23: #{tpu_custom_call.1} parent=1 // pred_check_branch
      %44 = sbr.rel (0) target = $region25
    $region24: #{tpu_custom_call.1} parent=1 // pred_region
      _
    $region25: #{tpu_custom_call.1} parent=1 // pred_fallthru
      _
    // Predicated region
    $region26: #{tpu_custom_call.1} parent=1 // pred_check
      _
    $region27: #{tpu_custom_call.1} parent=1 // pred_check_branch
      %46 = sbr.rel (0) target = $region29
    $region28: #{tpu_custom_call.1} parent=1 // pred_region
      _
    $region29: #{tpu_custom_call.1} parent=1 // pred_fallthru
      _
    // Predicated region
    $region30: #{tpu_custom_call.1} parent=1 // pred_check
      _
    $region31: #{tpu_custom_call.1} parent=1 // pred_check_branch
      %48 = sbr.rel (0) target = $region33
    $region32: #{tpu_custom_call.1} parent=1 // pred_region
      _
    $region33: #{tpu_custom_call.1} parent=1 // pred_fallthru
      _
    // Predicated region
    $region34: #{tpu_custom_call.1} parent=1 // pred_check
      _
    $region35: #{tpu_custom_call.1} parent=1 // pred_check_branch
      %50 = sbr.rel (0) target = $region37
    $region36: #{tpu_custom_call.1} parent=1 // pred_region
      %51 = dma.done [#allocation3], 256
    $region37: #{tpu_custom_call.1} parent=1 // pred_fallthru
      _
    // Predicated region
    $region38: #{tpu_custom_call.1} parent=1 // pred_check
      _
    $region39: #{tpu_custom_call.1} parent=1 // pred_check_branch
      %53 = sbr.rel (0) target = $region41
    $region40: #{tpu_custom_call.1} parent=1 // pred_region
      %54 = dma.done [#allocation5], 16
    $region41: #{tpu_custom_call.1} parent=1 // pred_fallthru
      _
    %v56 = vld [vmem:[#allocation2] sm:$0xff]
    %v57 = vld [vmem:[#allocation2 + $0x8] sm:$0xff]
    %v58 = vpack.c.bf16 %v57, %v56
    %v59 = vld [vmem:[%s1] sm:$0xf]
    %v60 = vld [vmem:[%s1 + $0x4] sm:$0xf]
    %v61 = vld [vmem:[%s2] sm:$0x1]
    %v63 = vlaneseq
    %v64 = vshrl.u32 %v63, 7
    %v65 = vsub.s32 0, %v64
    %v66 = vrot.slane %v61, %v65
    %v70 = vunpack.c.l.b16 %v59
    %v71 = vunpack.c.l.b16 %v60
    %v72 = vpack.c.b16 %v71, %v70
    %vm74 = vcmask 130048
    %v76 = vsel %vm74, %v58, 0
    %78 = vmatprep.subr.bf16.mxu0 0
    %79 = vmatpush1.bf16.msra.mxu0 0
    %80 = vmatprep.subr.bf16.mxu0 0
    %81 = vmatpush1.bf16.msra.mxu0 0
    %82 = vmatprep.subr.bf16.mxu0 0
    %83 = vmatpush1.bf16.msra.mxu0 0
    %84 = vmatprep.subr.bf16.mxu0 0
    %85 = vmatpush1.bf16.msra.mxu0 0
    %86 = vmatprep.subr.bf16.mxu0 0
    %87 = vmatpush1.bf16.msra.mxu0 0
    %88 = vmatprep.subr.bf16.mxu0 0
    %89 = vmatpush1.bf16.msra.mxu0 0
    %90 = vmatprep.subr.bf16.mxu0 0
    %91 = vmatpush1.bf16.msra.mxu0 0
    %92 = vmatprep.subr.bf16.mxu0 0
    %93 = vmatpush1.bf16.msra.mxu0 %v72
    %94 = vmatprep.subr.bf16.mxu0 0
    %95 = vmatpush2.bf16.msra.mxu0 0
    %96 = vmatprep.subr.bf16.mxu0 0
    %97 = vmatpush2.bf16.msra.mxu0 0
    %98 = vmatprep.subr.bf16.mxu0 0
    %99 = vmatpush2.bf16.msra.mxu0 0
    %100 = vmatprep.subr.bf16.mxu0 0
    %101 = vmatpush2.bf16.msra.mxu0 0
    %102 = vmatprep.subr.bf16.mxu0 0
    %103 = vmatpush2.bf16.msra.mxu0 0
    %104 = vmatprep.subr.bf16.mxu0 0
    %105 = vmatpush2.bf16.msra.mxu0 0
    %106 = vmatprep.subr.bf16.mxu0 0
    %107 = vmatpush2.bf16.msra.mxu0 0
    %108 = vmatprep.subr.bf16.mxu0 0
    %109 = vmatpush2.bf16.msra.mxu0 0
    %110 = vmatprep.mubr.bf16.mxu0 0
    %111 = vmatmul.mubr.bf16.gmra.mxu0 %v76
    %v112 = vpop.f32.mrf.mxu0
    %v113 = vadd.f32 %v66, %v112
    %v114 = vpop.f32.mrf.mxu0
    %v115 = vpop.f32.mrf.mxu0
    %v116 = vadd.f32 %v66, %v115
    %v117 = vpop.f32.mrf.mxu0
    %118 = vdwg.mxu0
    %v119 = vmax.f32 %v113, 0.0
    %v120 = vmax.f32 %v116, 0.0
    %v121 = vpack.c.bf16 %v120, %v119
    %v122 = vld [vmem:[%s3] sm:$0xf]
    %v123 = vld [vmem:[%s3 + $0x4] sm:$0xf]
    %v124 = vld [vmem:[%s3 + $0x8] sm:$0xf]
    %v125 = vld [vmem:[%s3 + $0xc] sm:$0xf]
    %v126 = vld [vmem:[%s3 + $0x10] sm:$0xf]
    %v127 = vld [vmem:[%s3 + $0x14] sm:$0xf]
    %v128 = vld [vmem:[%s3 + $0x18] sm:$0xf]
    %v129 = vld [vmem:[%s3 + $0x1c] sm:$0xf]
    %v130 = vld [vmem:[#allocation4] sm:$0x1]
    %v132 = vlaneseq
    %v133 = vshrl.u32 %v132, 7
    %v134 = vsub.s32 0, %v133
    %v135 = vrot.slane %v130, %v134
    %v145 = vunpack.c.l.b16 %v122
    %v146 = vunpack.c.l.b16 %v123
    %v147 = vunpack.c.l.b16 %v124
    %v148 = vunpack.c.l.b16 %v125
    %v149 = vunpack.c.l.b16 %v126
    %v150 = vunpack.c.l.b16 %v127
    %v151 = vunpack.c.l.b16 %v128
    %v152 = vunpack.c.l.b16 %v129
    %v153 = vpack.c.b16 %v146, %v145
    %v154 = vpack.c.b16 %v148, %v147
    %v155 = vpack.c.b16 %v150, %v149
    %v156 = vpack.c.b16 %v152, %v151
    %vm161 = vcmask 523264
    %v163 = vsel %vm161, %v121, 0
    %165 = vmatprep.subr.bf16.mxu0 0
    %166 = vmatpush1.bf16.msra.mxu0 0
    %167 = vmatprep.subr.bf16.mxu0 0
    %168 = vmatpush1.bf16.msra.mxu0 0
    %169 = vmatprep.subr.bf16.mxu0 0
    %170 = vmatpush1.bf16.msra.mxu0 0
    %171 = vmatprep.subr.bf16.mxu0 0
    %172 = vmatpush1.bf16.msra.mxu0 0
    %173 = vmatprep.subr.bf16.mxu0 0
    %174 = vmatpush1.bf16.msra.mxu0 %v156
    %175 = vmatprep.subr.bf16.mxu0 0
    %176 = vmatpush1.bf16.msra.mxu0 %v155
    %177 = vmatprep.subr.bf16.mxu0 0
    %178 = vmatpush1.bf16.msra.mxu0 %v154
    %179 = vmatprep.subr.bf16.mxu0 0
    %180 = vmatpush1.bf16.msra.mxu0 %v153
    %181 = vmatprep.subr.bf16.mxu0 0
    %182 = vmatpush2.bf16.msra.mxu0 0
    %183 = vmatprep.subr.bf16.mxu0 0
    %184 = vmatpush2.bf16.msra.mxu0 0
    %185 = vmatprep.subr.bf16.mxu0 0
    %186 = vmatpush2.bf16.msra.mxu0 0
    %187 = vmatprep.subr.bf16.mxu0 0
    %188 = vmatpush2.bf16.msra.mxu0 0
    %189 = vmatprep.subr.bf16.mxu0 0
    %190 = vmatpush2.bf16.msra.mxu0 0
    %191 = vmatprep.subr.bf16.mxu0 0
    %192 = vmatpush2.bf16.msra.mxu0 0
    %193 = vmatprep.subr.bf16.mxu0 0
    %194 = vmatpush2.bf16.msra.mxu0 0
    %195 = vmatprep.subr.bf16.mxu0 0
    %196 = vmatpush2.bf16.msra.mxu0 0
    %197 = vmatprep.mubr.bf16.mxu0 0
    %198 = vmatmul.mubr.bf16.gmra.mxu0 %v163
    %v199 = vpop.f32.mrf.mxu0
    %v200 = vadd.f32 %v135, %v199
    %v201 = vpop.f32.mrf.mxu0
    %v202 = vpop.f32.mrf.mxu0
    %v203 = vadd.f32 %v135, %v202
    %v204 = vpop.f32.mrf.mxu0
    %205 = vdwg.mxu0
    %v206 = vmax.f32 %v200, 0.0
    %v207 = vmax.f32 %v203, 0.0
    %v208 = vpack.c.bf16 %v207, %v206
    %v209 = vld [vmem:[%s5] sm:$0xf]
    %v210 = vld [vmem:[%s5 + $0x4] sm:$0xf]
    %v211 = vld [vmem:[%s5 + $0x8] sm:$0xf]
    %v212 = vld [vmem:[%s5 + $0xc] sm:$0xf]
    %v213 = vld [vmem:[%s5 + $0x10] sm:$0xf]
    %v214 = vld [vmem:[%s5 + $0x14] sm:$0xf]
    %v215 = vld [vmem:[%s5 + $0x18] sm:$0xf]
    %v216 = vld [vmem:[%s5 + $0x1c] sm:$0xf]
    %v217 = vld [vmem:[%s6] sm:$0x1]
    %v219 = vlaneseq
    %v220 = vshrl.u32 %v219, 7
    %v221 = vsub.s32 0, %v220
    %v222 = vrot.slane %v217, %v221
    %v232 = vunpack.c.l.b16 %v209
    %v233 = vunpack.c.l.b16 %v210
    %v234 = vunpack.c.l.b16 %v211
    %v235 = vunpack.c.l.b16 %v212
    %v236 = vunpack.c.l.b16 %v213
    %v237 = vunpack.c.l.b16 %v214
    %v238 = vunpack.c.l.b16 %v215
    %v239 = vunpack.c.l.b16 %v216
    %v240 = vpack.c.b16 %v233, %v232
    %v241 = vpack.c.b16 %v235, %v234
    %v242 = vpack.c.b16 %v237, %v236
    %v243 = vpack.c.b16 %v239, %v238
    %v249 = vsel %vm161, %v208, 0
    %251 = vmatprep.subr.bf16.mxu0 0
    %252 = vmatpush1.bf16.msra.mxu0 0
    %253 = vmatprep.subr.bf16.mxu0 0
    %254 = vmatpush1.bf16.msra.mxu0 0
    %255 = vmatprep.subr.bf16.mxu0 0
    %256 = vmatpush1.bf16.msra.mxu0 0
    %257 = vmatprep.subr.bf16.mxu0 0
    %258 = vmatpush1.bf16.msra.mxu0 0
    %259 = vmatprep.subr.bf16.mxu0 0
    %260 = vmatpush1.bf16.msra.mxu0 %v243
    %261 = vmatprep.subr.bf16.mxu0 0
    %262 = vmatpush1.bf16.msra.mxu0 %v242
    %263 = vmatprep.subr.bf16.mxu0 0
    %264 = vmatpush1.bf16.msra.mxu0 %v241
    %265 = vmatprep.subr.bf16.mxu0 0
    %266 = vmatpush1.bf16.msra.mxu0 %v240
    %267 = vmatprep.subr.bf16.mxu0 0
    %268 = vmatpush2.bf16.msra.mxu0 0
    %269 = vmatprep.subr.bf16.mxu0 0
    %270 = vmatpush2.bf16.msra.mxu0 0
    %271 = vmatprep.subr.bf16.mxu0 0
    %272 = vmatpush2.bf16.msra.mxu0 0
    %273 = vmatprep.subr.bf16.mxu0 0
    %274 = vmatpush2.bf16.msra.mxu0 0
    %275 = vmatprep.subr.bf16.mxu0 0
    %276 = vmatpush2.bf16.msra.mxu0 0
    %277 = vmatprep.subr.bf16.mxu0 0
    %278 = vmatpush2.bf16.msra.mxu0 0
    %279 = vmatprep.subr.bf16.mxu0 0
    %280 = vmatpush2.bf16.msra.mxu0 0
    %281 = vmatprep.subr.bf16.mxu0 0
    %282 = vmatpush2.bf16.msra.mxu0 0
    %283 = vmatprep.mubr.bf16.mxu0 0
    %284 = vmatmul.mubr.bf16.gmra.mxu0 %v249
    %v285 = vpop.f32.mrf.mxu0
    %v286 = vadd.f32 %v222, %v285
    %v287 = vpop.f32.mrf.mxu0
    %v288 = vpop.f32.mrf.mxu0
    %v289 = vadd.f32 %v222, %v288
    %v290 = vpop.f32.mrf.mxu0
    %291 = vdwg.mxu0
    %v292 = vld [vmem:[%s7] sm:$0x1]
    %v294 = vlaneseq
    %v295 = vshrl.u32 %v294, 7
    %v296 = vsub.s32 0, %v295
    %v297 = vrot.slane %v292, %v296
    %v299 = vmul.f32 %v297, %v286
    %v300 = vmul.f32 %v297, %v289
    %vm301 = vcmask 31744
    %v302 = vsel %vm301, %v299, -inf
    %303 = vmax.xlane.f32.xlu0 %v302
    %v304 = vpop.xlane.xlu0 %303
    %v305 = vsel %vm301, %v300, -inf
    %306 = vmax.xlane.f32.xlu0 %v305
    %v307 = vpop.xlane.xlu0 %306
    %v308 = vsub.f32 %v299, %v304
    %v309 = vsub.f32 %v300, %v307
    %v310 = vmul.f32 %v308, 1.442695
    %v311 = vpow.pop %v310
    %v312 = vmul.f32 %v309, 1.442695
    %v313 = vpow.pop %v312
    %v314 = vsel %vm301, %v311, 0.0
    %315 = vadd.xlane.f32.xlu0 %v314
    %v316 = vpop.xlane.xlu0 %315
    %v317 = vsel %vm301, %v313, 0.0
    %318 = vadd.xlane.f32.xlu0 %v317
    %v319 = vpop.xlane.xlu0 %318
    %v320 = vlog2.pop %v316
    %v321 = vmul.f32 %v320, 0.6931472
    %v322 = vlog2.pop %v319
    %v323 = vmul.f32 %v322, 0.6931472
    %v324 = vsub.f32 %v308, %v321
    %v325 = vsub.f32 %v309, %v323
    %326 = vst.msk [vmem:[%s8] sm:$0xff] %vm301, %v324
    %327 = vst.msk [vmem:[%s8 + $0x8] sm:$0xff] %vm301, %v325
    // Predicated region
    $region42: #{tpu_custom_call.1} parent=1 // pred_check
      _
    $region43: #{tpu_custom_call.1} parent=1 // pred_check_branch
      %329 = sbr.rel (0) target = $region45
    $region44: #{tpu_custom_call.1} parent=1 // pred_region
      _
    $region45: #{tpu_custom_call.1} parent=1 // pred_fallthru
      _
    // Predicated region
    $region46: #{tpu_custom_call.1} parent=1 // pred_check
      _
    $region47: #{tpu_custom_call.1} parent=1 // pred_check_branch
      %331 = sbr.rel (0) target = $region49
    $region48: #{tpu_custom_call.1} parent=1 // pred_region
      _
    $region49: #{tpu_custom_call.1} parent=1 // pred_fallthru
      _
    %332 = vsyncpa [#allocation3], 1
    %333 = vsyncpa [#allocation5], 1

</llo_original>
